<compile_context>
chip_gen: v7x
topology: tpu7x:2x2x1
jax: 0.10.0
libtpu: 0.0.40
codegen_flags: <defaults>
</compile_context>

<pallas_src>
import jax
import jax.numpy as jnp
from jax.experimental import pallas as pl
from jax.experimental.pallas import tpu as pltpu

EPS = 1e-5


def _residual_block_kernel(x_ref, m_ref, p2_ref, bn_ref, sel_ref, selt_ref, out_ref):
    """Fused residual block on lane-dense (N*H, W*C) slabs.

    x_ref   : (NH, WC)        input slab (row = (n, h), lane = w*C + c)
    m_ref   : (2, 3*WC, WC)   stacked banded conv weights [M0; M1; M2] per conv
    p2_ref  : (2*NH, NH)      [P_up; P_dn] boundary-aware row-shift matrices
                              (P_up picks row (n, h-1), zero at h == 0;
                               P_dn picks row (n, h+1), zero at h == H-1)
    bn_ref  : (4, C)          [gamma1, beta1, gamma2, beta2]
    sel_ref : (WC, C)         0/1 selector: lane (w*C + c) -> channel c
    selt_ref: (C, WC)         transpose of sel (channel -> lane broadcast)
    out_ref : (NH, WC)
    """
    NH, WC = x_ref.shape
    C = sel_ref.shape[1]
    W = WC // C
    inv_count = 1.0 / float(NH * W)          # elements per channel = N*H*W

    x = x_ref[...]
    p2 = p2_ref[...]
    sel = sel_ref[...]
    selt = selt_ref[...]
    bn = bn_ref[...]

    def conv3x3(src, k):
        # (a) both vertical-neighbour rows (zeroed at image boundaries) in one
        #     matmul; (b) one wide K=3*WC matmul against the stacked banded
        #     weights (horizontal taps + width zero-padding in the bands).
        shifted = jnp.dot(p2, src, preferred_element_type=jnp.float32)       # (2NH, WC)
        xcat = jnp.concatenate(
            [shifted[0:NH, :], src, shifted[NH:2 * NH, :]], axis=1)          # (NH, 3WC)
        return jnp.dot(xcat, m_ref[k], preferred_element_type=jnp.float32)   # (NH, WC)

    def batchnorm(y, gamma, beta, relu):
        # Single-pass batch statistics (sum, sum-of-squares) reduced per channel
        # with a selector matmul; normalization applied as one FMA per element.
        col = jnp.concatenate([jnp.sum(y, axis=0, keepdims=True),
                               jnp.sum(y * y, axis=0, keepdims=True)], axis=0)   # (2, WC)
        stats = jnp.dot(col, sel, preferred_element_type=jnp.float32) * inv_count  # (2, C)
        mean = stats[0:1, :]
        var = stats[1:2, :] - mean * mean      # biased variance (PyTorch forward)
        scale = gamma * jax.lax.rsqrt(var + EPS)
        shift = beta - mean * scale
        wide = jnp.dot(jnp.concatenate([scale, shift], axis=0), selt,
                       preferred_element_type=jnp.float32)                   # (2, WC)
        out = y * wide[0:1, :] + wide[1:2, :]
        return jnp.maximum(out, 0.0) if relu else out

    # conv1 -> BN1 -> ReLU
    y = conv3x3(x, 0)
    y = batchnorm(y, bn[0:1, :], bn[1:2, :], relu=True)
    # conv2 -> BN2
    y = conv3x3(y, 1)
    y = batchnorm(y, bn[2:3, :], bn[3:4, :], relu=False)
    # residual add + ReLU (lane-dense, unmasked store)
    out_ref[...] = jnp.maximum(y + x, 0.0).astype(out_ref.dtype)


def _stacked_band_weights(w_hwio, W):
    """(3, 3, C, C) HWIO -> (3*W*C, W*C) stacked banded matrix [M0; M1; M2].

    M_kh[w_in*C + ci, w_out*C + co] = w[kh, w_in - w_out + 1, ci, co]
    (zero outside the +/-1 band; width zero-padding handled by band truncation).
    """
    mats = []
    for kh in range(3):
        m = sum(jnp.kron(jnp.eye(W, k=1 - kw, dtype=jnp.float32),
                         w_hwio[kh, kw].astype(jnp.float32))
                for kw in range(3))
        mats.append(m)
    return jnp.concatenate(mats, axis=0)


def _row_shift_matrix(N, H):
    """Boundary-aware (2*NH, NH) matrix stacking [P_up; P_dn]."""
    NH = N * H
    h = jnp.arange(NH) % H
    p_up = jnp.eye(NH, k=-1, dtype=jnp.float32) \
        * (h != 0).astype(jnp.float32)[:, None]
    p_dn = jnp.eye(NH, k=1, dtype=jnp.float32) \
        * (h != H - 1).astype(jnp.float32)[:, None]
    return jnp.concatenate([p_up, p_dn], axis=0)


def residual_block_pallas(x_nhwc, params):
    """x_nhwc: (N, H, W, C) float32.  params: (w1,b1,g1,bt1,w2,b2,g2,bt2)."""
    N, H, W, C = x_nhwc.shape
    # Conv biases are dropped: training-mode BN subtracts the per-channel batch
    # mean, so a constant per-channel bias cancels exactly.
    w1, _b1, g1, bt1, w2, _b2, g2, bt2 = params

    WC = W * C
    NH = N * H
    mstack = jnp.stack([_stacked_band_weights(w1, W),
                        _stacked_band_weights(w2, W)], axis=0)      # (2, 3WC, WC)
    p2 = _row_shift_matrix(N, H)                                    # (2NH, NH)
    sel = jnp.tile(jnp.eye(C, dtype=jnp.float32), (W, 1))           # (WC, C)
    selt = jnp.transpose(sel)                                       # (C, WC)
    bn = jnp.stack([g1, bt1, g2, bt2], axis=0).astype(jnp.float32)  # (4, C)
    x2d = x_nhwc.reshape(NH, WC).astype(jnp.float32)

    vmem = pl.BlockSpec(memory_space=pltpu.MemorySpace.VMEM)
    out2d = pl.pallas_call(
        _residual_block_kernel,
        out_shape=jax.ShapeDtypeStruct((NH, WC), jnp.float32),
        in_specs=[vmem] * 6,
        out_specs=vmem,
    )(x2d, mstack, p2, bn, sel, selt)
    return out2d.reshape(N, H, W, C)


def ref_forward(x_nhwc, params):
    """Pure-JAX reference with identical semantics (NHWC, training-mode BN)."""
    w1, b1, g1, bt1, w2, b2, g2, bt2 = params

    def conv(x, w, b):
        y = jax.lax.conv_general_dilated(
            x, w, window_strides=(1, 1), padding=((1, 1), (1, 1)),
            dimension_numbers=('NHWC', 'HWIO', 'NHWC'))
        return y + b[None, None, None, :]

    def bn(y, g, bt):
        mean = jnp.mean(y, axis=(0, 1, 2), keepdims=True)
        var = jnp.mean((y - mean) ** 2, axis=(0, 1, 2), keepdims=True)
        return (y - mean) * jax.lax.rsqrt(var + EPS) * g[None, None, None, :] \
            + bt[None, None, None, :]

    y = jnp.maximum(bn(conv(x_nhwc, w1, b1), g1, bt1), 0.0)
    y = bn(conv(y, w2, b2), g2, bt2)
    return jnp.maximum(y + x_nhwc, 0.0)


if __name__ == "__main__":
    # Small shapes consistent with the module: batch=2, channels=8, spatial=16x16
    # (W*C = 128 gives a fully lane-dense working layout).
    N, C, H, W = 2, 8, 16, 16

    key = jax.random.PRNGKey(0)
    kx, kw1, kb1, kw2, kb2 = jax.random.split(key, 5)

    # PyTorch-style NCHW input.
    x_nchw = jax.random.normal(kx, (N, C, H, W), jnp.float32)

    # Deterministic synthetic parameters (shapes per nn.Conv2d / nn.BatchNorm2d).
    w1 = jax.random.normal(kw1, (3, 3, C, C), jnp.float32) * 0.1   # HWIO
    b1 = jax.random.normal(kb1, (C,), jnp.float32) * 0.1
    w2 = jax.random.normal(kw2, (3, 3, C, C), jnp.float32) * 0.1   # HWIO
    b2 = jax.random.normal(kb2, (C,), jnp.float32) * 0.1
    g1 = jnp.ones((C,), jnp.float32); bt1 = jnp.zeros((C,), jnp.float32)
    g2 = jnp.ones((C,), jnp.float32); bt2 = jnp.zeros((C,), jnp.float32)
    params = (w1, b1, g1, bt1, w2, b2, g2, bt2)

    # NCHW -> NHWC for the kernel, back to NCHW afterwards.
    x_nhwc = jnp.transpose(x_nchw, (0, 2, 3, 1))
    out_nhwc = residual_block_pallas(x_nhwc, params)
    out_nchw = jnp.transpose(out_nhwc, (0, 3, 1, 2))
    jax.block_until_ready(out_nchw)

    # Correctness check against a pure-JAX reference.
    ref_nchw = jnp.transpose(ref_forward(x_nhwc, params), (0, 3, 1, 2))
    max_err = float(jnp.max(jnp.abs(out_nchw - ref_nchw)))
    assert max_err < 2e-3, f"mismatch vs reference, max abs err = {max_err}"

    print("KERNEL_OK")
</pallas_src>

<mosaic_0001>
module attributes {stable_mosaic.version = 11 : i64} {
  func.func @_residual_block_kernel(%arg0: memref<32x128xf32, #tpu.memory_space<vmem>>, %arg1: memref<2x384x128xf32, #tpu.memory_space<vmem>>, %arg2: memref<64x32xf32, #tpu.memory_space<vmem>>, %arg3: memref<4x8xf32, #tpu.memory_space<vmem>>, %arg4: memref<128x8xf32, #tpu.memory_space<vmem>>, %arg5: memref<8x128xf32, #tpu.memory_space<vmem>>, %arg6: memref<32x128xf32, #tpu.memory_space<vmem>>) attributes {dimension_semantics = [], scalar_prefetch = 0 : i64, scratch_operands = 0 : i64, tpu.core_type = #tpu.core_type<tc>} {
    %c0 = arith.constant 0 : index
    %c0_0 = arith.constant 0 : index
    %0 = vector.load %arg0[%c0, %c0_0] : memref<32x128xf32, #tpu.memory_space<vmem>>, vector<32x128xf32>
    %c0_1 = arith.constant 0 : index
    %c0_2 = arith.constant 0 : index
    %1 = vector.load %arg2[%c0_1, %c0_2] : memref<64x32xf32, #tpu.memory_space<vmem>>, vector<64x32xf32>
    %c0_3 = arith.constant 0 : index
    %c0_4 = arith.constant 0 : index
    %2 = vector.load %arg4[%c0_3, %c0_4] : memref<128x8xf32, #tpu.memory_space<vmem>>, vector<128x8xf32>
    %c0_5 = arith.constant 0 : index
    %c0_6 = arith.constant 0 : index
    %3 = vector.load %arg5[%c0_5, %c0_6] : memref<8x128xf32, #tpu.memory_space<vmem>>, vector<8x128xf32>
    %c0_7 = arith.constant 0 : index
    %c0_8 = arith.constant 0 : index
    %4 = vector.load %arg3[%c0_7, %c0_8] : memref<4x8xf32, #tpu.memory_space<vmem>>, vector<4x8xf32>
    %cst = arith.constant dense<0.000000e+00> : vector<64x128xf32>
    %5 = tpu.matmul %1, %0, %cst {dimension_numbers = #tpu.dot_dimension_numbers<[1], [0], [0], [1], [0, 0, 1, 1], [], []>} : vector<64x32xf32>, vector<32x128xf32>, vector<64x128xf32> -> vector<64x128xf32>
    %6 = vector.extract_strided_slice %5 {offsets = [0, 0], sizes = [32, 128], strides = [1, 1]} : vector<64x128xf32> to vector<32x128xf32>
    %7 = vector.extract_strided_slice %5 {offsets = [32, 0], sizes = [32, 128], strides = [1, 1]} : vector<64x128xf32> to vector<32x128xf32>
    %8 = tpu.concatenate %6, %0, %7 in 1 : vector<32x128xf32>, vector<32x128xf32>, vector<32x128xf32> -> vector<32x384xf32>
    %c0_9 = arith.constant 0 : index
    %c0_10 = arith.constant 0 : index
    %c0_11 = arith.constant 0 : index
    %9 = vector.load %arg1[%c0_9, %c0_10, %c0_11] : memref<2x384x128xf32, #tpu.memory_space<vmem>>, vector<1x384x128xf32>
    %10 = vector.shape_cast %9 : vector<1x384x128xf32> to vector<384x128xf32>
    %cst_12 = arith.constant dense<0.000000e+00> : vector<32x128xf32>
    %11 = tpu.matmul %8, %10, %cst_12 {dimension_numbers = #tpu.dot_dimension_numbers<[1], [0], [0], [1], [0, 0, 1, 1], [], []>} : vector<32x384xf32>, vector<384x128xf32>, vector<32x128xf32> -> vector<32x128xf32>
    %12 = vector.extract_strided_slice %4 {offsets = [0, 0], sizes = [1, 8], strides = [1, 1]} : vector<4x8xf32> to vector<1x8xf32>
    %13 = vector.extract_strided_slice %4 {offsets = [1, 0], sizes = [1, 8], strides = [1, 1]} : vector<4x8xf32> to vector<1x8xf32>
    %cst_13 = arith.constant dense<0.000000e+00> : vector<128xf32>
    %14 = vector.multi_reduction <add>, %11, %cst_13 [0] : vector<32x128xf32> to vector<128xf32>
    %15 = vector.shape_cast %14 : vector<128xf32> to vector<1x128xf32>
    %16 = arith.mulf %11, %11 : vector<32x128xf32>
    %cst_14 = arith.constant dense<0.000000e+00> : vector<128xf32>
    %17 = vector.multi_reduction <add>, %16, %cst_14 [0] : vector<32x128xf32> to vector<128xf32>
    %18 = vector.shape_cast %17 : vector<128xf32> to vector<1x128xf32>
    %19 = tpu.concatenate %15, %18 in 0 : vector<1x128xf32>, vector<1x128xf32> -> vector<2x128xf32>
    %cst_15 = arith.constant dense<0.000000e+00> : vector<2x8xf32>
    %20 = tpu.matmul %19, %2, %cst_15 {dimension_numbers = #tpu.dot_dimension_numbers<[1], [0], [0], [1], [0, 0, 1, 1], [], []>} : vector<2x128xf32>, vector<128x8xf32>, vector<2x8xf32> -> vector<2x8xf32>
    %cst_16 = arith.constant 0.001953125 : f32
    %21 = vector.broadcast %cst_16 : f32 to vector<2x8xf32>
    %22 = arith.mulf %20, %21 : vector<2x8xf32>
    %23 = vector.extract_strided_slice %22 {offsets = [0, 0], sizes = [1, 8], strides = [1, 1]} : vector<2x8xf32> to vector<1x8xf32>
    %24 = vector.extract_strided_slice %22 {offsets = [1, 0], sizes = [1, 8], strides = [1, 1]} : vector<2x8xf32> to vector<1x8xf32>
    %25 = arith.mulf %23, %23 : vector<1x8xf32>
    %26 = arith.subf %24, %25 : vector<1x8xf32>
    %cst_17 = arith.constant 9.99999974E-6 : f32
    %27 = vector.broadcast %cst_17 : f32 to vector<1x8xf32>
    %28 = arith.addf %26, %27 : vector<1x8xf32>
    %29 = math.rsqrt %28 : vector<1x8xf32>
    %30 = arith.mulf %12, %29 : vector<1x8xf32>
    %31 = arith.mulf %23, %30 : vector<1x8xf32>
    %32 = arith.subf %13, %31 : vector<1x8xf32>
    %33 = tpu.concatenate %30, %32 in 0 : vector<1x8xf32>, vector<1x8xf32> -> vector<2x8xf32>
    %cst_18 = arith.constant dense<0.000000e+00> : vector<2x128xf32>
    %34 = tpu.matmul %33, %3, %cst_18 {dimension_numbers = #tpu.dot_dimension_numbers<[1], [0], [0], [1], [0, 0, 1, 1], [], []>} : vector<2x8xf32>, vector<8x128xf32>, vector<2x128xf32> -> vector<2x128xf32>
    %35 = vector.extract_strided_slice %34 {offsets = [0, 0], sizes = [1, 128], strides = [1, 1]} : vector<2x128xf32> to vector<1x128xf32>
    %36 = vector.broadcast %35 : vector<1x128xf32> to vector<32x128xf32>
    %37 = arith.mulf %11, %36 : vector<32x128xf32>
    %38 = vector.extract_strided_slice %34 {offsets = [1, 0], sizes = [1, 128], strides = [1, 1]} : vector<2x128xf32> to vector<1x128xf32>
    %39 = vector.broadcast %38 : vector<1x128xf32> to vector<32x128xf32>
    %40 = arith.addf %37, %39 : vector<32x128xf32>
    %cst_19 = arith.constant 0.000000e+00 : f32
    %41 = vector.broadcast %cst_19 : f32 to vector<32x128xf32>
    %42 = arith.maximumf %40, %41 : vector<32x128xf32>
    %cst_20 = arith.constant dense<0.000000e+00> : vector<64x128xf32>
    %43 = tpu.matmul %1, %42, %cst_20 {dimension_numbers = #tpu.dot_dimension_numbers<[1], [0], [0], [1], [0, 0, 1, 1], [], []>} : vector<64x32xf32>, vector<32x128xf32>, vector<64x128xf32> -> vector<64x128xf32>
    %44 = vector.extract_strided_slice %43 {offsets = [0, 0], sizes = [32, 128], strides = [1, 1]} : vector<64x128xf32> to vector<32x128xf32>
    %45 = vector.extract_strided_slice %43 {offsets = [32, 0], sizes = [32, 128], strides = [1, 1]} : vector<64x128xf32> to vector<32x128xf32>
    %46 = tpu.concatenate %44, %42, %45 in 1 : vector<32x128xf32>, vector<32x128xf32>, vector<32x128xf32> -> vector<32x384xf32>
    %c1 = arith.constant 1 : index
    %c0_21 = arith.constant 0 : index
    %c0_22 = arith.constant 0 : index
    %47 = vector.load %arg1[%c1, %c0_21, %c0_22] : memref<2x384x128xf32, #tpu.memory_space<vmem>>, vector<1x384x128xf32>
    %48 = vector.shape_cast %47 : vector<1x384x128xf32> to vector<384x128xf32>
    %cst_23 = arith.constant dense<0.000000e+00> : vector<32x128xf32>
    %49 = tpu.matmul %46, %48, %cst_23 {dimension_numbers = #tpu.dot_dimension_numbers<[1], [0], [0], [1], [0, 0, 1, 1], [], []>} : vector<32x384xf32>, vector<384x128xf32>, vector<32x128xf32> -> vector<32x128xf32>
    %50 = vector.extract_strided_slice %4 {offsets = [2, 0], sizes = [1, 8], strides = [1, 1]} : vector<4x8xf32> to vector<1x8xf32>
    %51 = vector.extract_strided_slice %4 {offsets = [3, 0], sizes = [1, 8], strides = [1, 1]} : vector<4x8xf32> to vector<1x8xf32>
    %cst_24 = arith.constant dense<0.000000e+00> : vector<128xf32>
    %52 = vector.multi_reduction <add>, %49, %cst_24 [0] : vector<32x128xf32> to vector<128xf32>
    %53 = vector.shape_cast %52 : vector<128xf32> to vector<1x128xf32>
    %54 = arith.mulf %49, %49 : vector<32x128xf32>
    %cst_25 = arith.constant dense<0.000000e+00> : vector<128xf32>
    %55 = vector.multi_reduction <add>, %54, %cst_25 [0] : vector<32x128xf32> to vector<128xf32>
    %56 = vector.shape_cast %55 : vector<128xf32> to vector<1x128xf32>
    %57 = tpu.concatenate %53, %56 in 0 : vector<1x128xf32>, vector<1x128xf32> -> vector<2x128xf32>
    %cst_26 = arith.constant dense<0.000000e+00> : vector<2x8xf32>
    %58 = tpu.matmul %57, %2, %cst_26 {dimension_numbers = #tpu.dot_dimension_numbers<[1], [0], [0], [1], [0, 0, 1, 1], [], []>} : vector<2x128xf32>, vector<128x8xf32>, vector<2x8xf32> -> vector<2x8xf32>
    %cst_27 = arith.constant 0.001953125 : f32
    %59 = vector.broadcast %cst_27 : f32 to vector<2x8xf32>
    %60 = arith.mulf %58, %59 : vector<2x8xf32>
    %61 = vector.extract_strided_slice %60 {offsets = [0, 0], sizes = [1, 8], strides = [1, 1]} : vector<2x8xf32> to vector<1x8xf32>
    %62 = vector.extract_strided_slice %60 {offsets = [1, 0], sizes = [1, 8], strides = [1, 1]} : vector<2x8xf32> to vector<1x8xf32>
    %63 = arith.mulf %61, %61 : vector<1x8xf32>
    %64 = arith.subf %62, %63 : vector<1x8xf32>
    %cst_28 = arith.constant 9.99999974E-6 : f32
    %65 = vector.broadcast %cst_28 : f32 to vector<1x8xf32>
    %66 = arith.addf %64, %65 : vector<1x8xf32>
    %67 = math.rsqrt %66 : vector<1x8xf32>
    %68 = arith.mulf %50, %67 : vector<1x8xf32>
    %69 = arith.mulf %61, %68 : vector<1x8xf32>
    %70 = arith.subf %51, %69 : vector<1x8xf32>
    %71 = tpu.concatenate %68, %70 in 0 : vector<1x8xf32>, vector<1x8xf32> -> vector<2x8xf32>
    %cst_29 = arith.constant dense<0.000000e+00> : vector<2x128xf32>
    %72 = tpu.matmul %71, %3, %cst_29 {dimension_numbers = #tpu.dot_dimension_numbers<[1], [0], [0], [1], [0, 0, 1, 1], [], []>} : vector<2x8xf32>, vector<8x128xf32>, vector<2x128xf32> -> vector<2x128xf32>
    %73 = vector.extract_strided_slice %72 {offsets = [0, 0], sizes = [1, 128], strides = [1, 1]} : vector<2x128xf32> to vector<1x128xf32>
    %74 = vector.broadcast %73 : vector<1x128xf32> to vector<32x128xf32>
    %75 = arith.mulf %49, %74 : vector<32x128xf32>
    %76 = vector.extract_strided_slice %72 {offsets = [1, 0], sizes = [1, 128], strides = [1, 1]} : vector<2x128xf32> to vector<1x128xf32>
    %77 = vector.broadcast %76 : vector<1x128xf32> to vector<32x128xf32>
    %78 = arith.addf %75, %77 : vector<32x128xf32>
    %79 = arith.addf %78, %0 : vector<32x128xf32>
    %cst_30 = arith.constant 0.000000e+00 : f32
    %80 = vector.broadcast %cst_30 : f32 to vector<32x128xf32>
    %81 = arith.maximumf %79, %80 : vector<32x128xf32>
    %c0_31 = arith.constant 0 : index
    %c0_32 = arith.constant 0 : index
    %82 = vector.load %arg6[%c0_31, %c0_32] : memref<32x128xf32, #tpu.memory_space<vmem>>, vector<32x128xf32>
    tpu.vector_store %arg6[%c0_31, %c0_32], %81 {strides = array<i32>} : memref<32x128xf32, #tpu.memory_space<vmem>>, vector<32x128xf32>,
    return
  }
}

</mosaic_0001>

<llo_original>
// kernel: tpu_custom_call.1
$region0: #{tpu_custom_call.1}
  #allocation0 [shape = 'u32[]', space=smem, size = 0x4, offset = 0x4, fixed_abs, tag = 'smem constant byte address 0x4 - core index']
  #allocation1 [shape = 'u32[144,128]{1,0:T(1,128)}', space=vmem, size = 0x12000, scoped, tag = 'internal scratch']
  %s0 = inlined_call_operand.vmem [shape: f32[32,128], index: 0, kind: input, shape index: {}]
  %s1 = inlined_call_operand.hbm [shape: f32[2,384,128], index: 1, kind: input, shape index: {}]
  %s2 = inlined_call_operand.vmem [shape: f32[64,32], index: 2, kind: input, shape index: {}]
  %s3 = inlined_call_operand.vmem [shape: f32[4,8], index: 3, kind: input, shape index: {}]
  %s4 = inlined_call_operand.vmem [shape: f32[128,8], index: 4, kind: input, shape index: {}]
  %s5 = inlined_call_operand.vmem [shape: f32[8,128], index: 5, kind: input, shape index: {}]
  %s6 = inlined_call_operand.hbm [shape: f32[32,128], index: 6, kind: output, shape index: {}]
  %s7 = sld [smem:[#allocation0]]
  $region38: #{tpu_custom_call.1} parent=0
    _
  %s9 = ssub.s32 1, %s7
  %s10 = scalar_select 0, %s9, %s7
  $region1: #{tpu_custom_call.1} parent=0
    #allocation2 [shape = 'u8[393216]{0}', space=vmem, size = 0x60000, scoped, tag = 'input window, operand 1, single buffered']
    #allocation3 [shape = 's32[1]{0}', space=sflag, size = 0x4, scoped, tag = 'scoped memory for tpu_custom_call.1']
    #allocation4 [shape = 's32[1]{0}', space=sflag, size = 0x4, scoped, tag = 'scoped memory for tpu_custom_call.1']
    #allocation5 [shape = 'u8[16384]{0}', space=vmem, size = 0x4000, scoped, tag = 'output window, operand 0, single buffered']
    %11 = vsyncpa [#allocation3], 0
    %12 = vsyncpa [#allocation4], 0
    // Predicated region
    $region2: #{tpu_custom_call.1} parent=1 // pred_check
      _
    $region3: #{tpu_custom_call.1} parent=1 // pred_check_branch
      %14 = sbr.rel (0) target = $region5
    $region4: #{tpu_custom_call.1} parent=1 // pred_region
      _
    $region5: #{tpu_custom_call.1} parent=1 // pred_fallthru
      _
    // Predicated region
    $region6: #{tpu_custom_call.1} parent=1 // pred_check
      _
    $region7: #{tpu_custom_call.1} parent=1 // pred_check_branch
      %16 = sbr.rel (0) target = $region9
    $region8: #{tpu_custom_call.1} parent=1 // pred_region
      %s18 = ssub.s32 12288, 12288
      %19 = vsyncadd [#allocation3], %s18
      %s20 = sshll.u32 [#allocation2], 4
      %s21 = int_to_ptr.vmem [resolvable:$true] %s20
      %26 = dma.hbm_to_vmem [thread:$0]  %s1, 12288, %s21, [#allocation3], 128, 128, 8
    $region9: #{tpu_custom_call.1} parent=1 // pred_fallthru
      _
    // Predicated region
    $region10: #{tpu_custom_call.1} parent=1 // pred_check
      _
    $region11: #{tpu_custom_call.1} parent=1 // pred_check_branch
      %28 = sbr.rel (0) target = $region13
    $region12: #{tpu_custom_call.1} parent=1 // pred_region
      _
    $region13: #{tpu_custom_call.1} parent=1 // pred_fallthru
      _
    // Predicated region
    $region14: #{tpu_custom_call.1} parent=1 // pred_check
      _
    $region15: #{tpu_custom_call.1} parent=1 // pred_check_branch
      %30 = sbr.rel (0) target = $region17
    $region16: #{tpu_custom_call.1} parent=1 // pred_region
      _
    $region17: #{tpu_custom_call.1} parent=1 // pred_fallthru
      _
    // Predicated region
    $region18: #{tpu_custom_call.1} parent=1 // pred_check
      _
    $region19: #{tpu_custom_call.1} parent=1 // pred_check_branch
      %32 = sbr.rel (0) target = $region21
    $region20: #{tpu_custom_call.1} parent=1 // pred_region
      _
    $region21: #{tpu_custom_call.1} parent=1 // pred_fallthru
      _
    // Predicated region
    $region22: #{tpu_custom_call.1} parent=1 // pred_check
      _
    $region23: #{tpu_custom_call.1} parent=1 // pred_check_branch
      %34 = sbr.rel (0) target = $region25
    $region24: #{tpu_custom_call.1} parent=1 // pred_region
      _
    $region25: #{tpu_custom_call.1} parent=1 // pred_fallthru
      _
    // Predicated region
    $region26: #{tpu_custom_call.1} parent=1 // pred_check
      _
    $region27: #{tpu_custom_call.1} parent=1 // pred_check_branch
      %36 = sbr.rel (0) target = $region29
    $region28: #{tpu_custom_call.1} parent=1 // pred_region
      %37 = dma.done [#allocation3], 12288
    $region29: #{tpu_custom_call.1} parent=1 // pred_fallthru
      _
    %v38 = vld [vmem:[%s0] sm:$0xff]
    %v39 = vld [vmem:[%s0 + $0x8] sm:$0xff]
    %v40 = vld [vmem:[%s0 + $0x10] sm:$0xff]
    %v41 = vld [vmem:[%s0 + $0x18] sm:$0xff]
    %v42 = vld [vmem:[%s2] sm:$0xff]
    %v43 = vld [vmem:[%s2 + $0x8] sm:$0xff]
    %v44 = vld [vmem:[%s2 + $0x10] sm:$0xff]
    %v45 = vld [vmem:[%s2 + $0x18] sm:$0xff]
    %v46 = vld [vmem:[%s2 + $0x20] sm:$0xff]
    %v47 = vld [vmem:[%s2 + $0x28] sm:$0xff]
    %v48 = vld [vmem:[%s2 + $0x30] sm:$0xff]
    %v49 = vld [vmem:[%s2 + $0x38] sm:$0xff]
    %v50 = vld [vmem:[%s4] sm:$0xff]
    %v51 = vld [vmem:[%s4 + $0x8] sm:$0xff]
    %v52 = vld [vmem:[%s4 + $0x10] sm:$0xff]
    %v53 = vld [vmem:[%s4 + $0x18] sm:$0xff]
    %v54 = vld [vmem:[%s4 + $0x20] sm:$0xff]
    %v55 = vld [vmem:[%s4 + $0x28] sm:$0xff]
    %v56 = vld [vmem:[%s4 + $0x30] sm:$0xff]
    %v57 = vld [vmem:[%s4 + $0x38] sm:$0xff]
    %v58 = vld [vmem:[%s4 + $0x40] sm:$0xff]
    %v59 = vld [vmem:[%s4 + $0x48] sm:$0xff]
    %v60 = vld [vmem:[%s4 + $0x50] sm:$0xff]
    %v61 = vld [vmem:[%s4 + $0x58] sm:$0xff]
    %v62 = vld [vmem:[%s4 + $0x60] sm:$0xff]
    %v63 = vld [vmem:[%s4 + $0x68] sm:$0xff]
    %v64 = vld [vmem:[%s4 + $0x70] sm:$0xff]
    %v65 = vld [vmem:[%s4 + $0x78] sm:$0xff]
    %v66 = vld [vmem:[%s5] sm:$0xff]
    %v67 = vld [vmem:[%s3] sm:$0xf]
    %vm68 = vcmask 261120
    %v70 = vsel %vm68, %v42, 0
    %v73 = vsel %vm68, %v43, 0
    %v76 = vsel %vm68, %v44, 0
    %v79 = vsel %vm68, %v45, 0
    %v82 = vsel %vm68, %v46, 0
    %v85 = vsel %vm68, %v47, 0
    %v88 = vsel %vm68, %v48, 0
    %v91 = vsel %vm68, %v49, 0
    %93 = vmatprep.subr.mxu0 0.0
    %94 = vmatpush1.msra.mxu0 %v38
    %95 = vmatprep.subr.mxu0 0.0
    %96 = vmatpush1.msra.mxu0 %v39
    %97 = vmatprep.subr.mxu0 0.0
    %98 = vmatpush1.msra.mxu0 %v40
    %99 = vmatprep.subr.mxu0 0.0
    %100 = vmatpush1.msra.mxu0 %v41
    %101 = vmatprep.subr.mxu0 0.0
    %102 = vmatpush1.msra.mxu0 0.0
    %103 = vmatprep.subr.mxu0 0.0
    %104 = vmatpush1.msra.mxu0 0.0
    %105 = vmatprep.subr.mxu0 0.0
    %106 = vmatpush1.msra.mxu0 0.0
    %107 = vmatprep.subr.mxu0 0.0
    %108 = vmatpush1.msra.mxu0 0.0
    %109 = vmatprep.subr.mxu0 0.0
    %110 = vmatpush1.msra.mxu0 0.0
    %111 = vmatprep.subr.mxu0 0.0
    %112 = vmatpush1.msra.mxu0 0.0
    %113 = vmatprep.subr.mxu0 0.0
    %114 = vmatpush1.msra.mxu0 0.0
    %115 = vmatprep.subr.mxu0 0.0
    %116 = vmatpush1.msra.mxu0 0.0
    %117 = vmatprep.subr.mxu0 0.0
    %118 = vmatpush1.msra.mxu0 0.0
    %119 = vmatprep.subr.mxu0 0.0
    %120 = vmatpush1.msra.mxu0 0.0
    %121 = vmatprep.subr.mxu0 0.0
    %122 = vmatpush1.msra.mxu0 0.0
    %123 = vmatprep.subr.mxu0 0.0
    %124 = vmatpush1.msra.mxu0 0.0
    %125 = vmatprep.subr.mxu0 0.0
    %126 = vmatpush1.msra.mxu0 0.0
    %127 = vmatprep.subr.mxu0 0.0
    %128 = vmatpush1.msra.mxu0 0.0
    %129 = vmatprep.subr.mxu0 0.0
    %130 = vmatpush1.msra.mxu0 0.0
    %131 = vmatprep.subr.mxu0 0.0
    %132 = vmatpush1.msra.mxu0 0.0
    %133 = vmatprep.subr.mxu0 0.0
    %134 = vmatpush1.msra.mxu0 0.0
    %135 = vmatprep.subr.mxu0 0.0
    %136 = vmatpush1.msra.mxu0 0.0
    %137 = vmatprep.subr.mxu0 0.0
    %138 = vmatpush1.msra.mxu0 0.0
    %139 = vmatprep.subr.mxu0 0.0
    %140 = vmatpush1.msra.mxu0 0.0
    %141 = vmatprep.subr.mxu0 0.0
    %142 = vmatpush1.msra.mxu0 0.0
    %143 = vmatprep.subr.mxu0 0.0
    %144 = vmatpush1.msra.mxu0 0.0
    %145 = vmatprep.subr.mxu0 0.0
    %146 = vmatpush1.msra.mxu0 0.0
    %147 = vmatprep.subr.mxu0 0.0
    %148 = vmatpush1.msra.mxu0 0.0
    %149 = vmatprep.subr.mxu0 0.0
    %150 = vmatpush1.msra.mxu0 0.0
    %151 = vmatprep.subr.mxu0 0.0
    %152 = vmatpush1.msra.mxu0 0.0
    %153 = vmatprep.subr.mxu0 0.0
    %154 = vmatpush1.msra.mxu0 0.0
    %155 = vmatprep.subr.mxu0 0.0
    %156 = vmatpush1.msra.mxu0 0.0
    %157 = vmatprep.mubr.f32.mxu0 0.0
    %158 = vmatmul.mubr.f32.gmra.mrb[0].mxu0 %v70
    %v159 = vpop.f32.mrb[0].mxu0
    %v160 = vadd.f32 0.0, %v159
    %v161 = vpop.f32.mrb[0].mxu0
    %162 = vmatprep.mubr.f32.mxu0 0.0
    %163 = vmatmul.mubr.f32.gmra.mrb[0].mxu0 %v73
    %v164 = vpop.f32.mrb[0].mxu0
    %v165 = vadd.f32 0.0, %v164
    %v166 = vpop.f32.mrb[0].mxu0
    %167 = vmatprep.mubr.f32.mxu0 0.0
    %168 = vmatmul.mubr.f32.gmra.mrb[0].mxu0 %v76
    %v169 = vpop.f32.mrb[0].mxu0
    %v170 = vadd.f32 0.0, %v169
    %v171 = vpop.f32.mrb[0].mxu0
    %172 = vmatprep.mubr.f32.mxu0 0.0
    %173 = vmatmul.mubr.f32.gmra.mrb[0].mxu0 %v79
    %v174 = vpop.f32.mrb[0].mxu0
    %v175 = vadd.f32 0.0, %v174
    %v176 = vpop.f32.mrb[0].mxu0
    %177 = vmatprep.mubr.f32.mxu0 0.0
    %178 = vmatmul.mubr.f32.gmra.mrb[0].mxu0 %v82
    %v179 = vpop.f32.mrb[0].mxu0
    %v180 = vadd.f32 0.0, %v179
    %v181 = vpop.f32.mrb[0].mxu0
    %182 = vmatprep.mubr.f32.mxu0 0.0
    %183 = vmatmul.mubr.f32.gmra.mrb[0].mxu0 %v85
    %v184 = vpop.f32.mrb[0].mxu0
    %v185 = vadd.f32 0.0, %v184
    %v186 = vpop.f32.mrb[0].mxu0
    %187 = vmatprep.mubr.f32.mxu0 0.0
    %188 = vmatmul.mubr.f32.gmra.mrb[0].mxu0 %v88
    %v189 = vpop.f32.mrb[0].mxu0
    %v190 = vadd.f32 0.0, %v189
    %v191 = vpop.f32.mrb[0].mxu0
    %192 = vmatprep.mubr.f32.mxu0 0.0
    %193 = vmatmul.mubr.f32.gmra.mrb[0].mxu0 %v91
    %v194 = vpop.f32.mrb[0].mxu0
    %v195 = vadd.f32 0.0, %v194
    %v196 = vpop.f32.mrb[0].mxu0
    %197 = vdwg.mxu0
    %v198 = vld [vmem:[#allocation2] sm:$0xff]
    %v199 = vld [vmem:[#allocation2 + $0x8] sm:$0xff]
    %v200 = vld [vmem:[#allocation2 + $0x10] sm:$0xff]
    %v201 = vld [vmem:[#allocation2 + $0x18] sm:$0xff]
    %v202 = vld [vmem:[#allocation2 + $0x20] sm:$0xff]
    %v203 = vld [vmem:[#allocation2 + $0x28] sm:$0xff]
    %v204 = vld [vmem:[#allocation2 + $0x30] sm:$0xff]
    %v205 = vld [vmem:[#allocation2 + $0x38] sm:$0xff]
    %v206 = vld [vmem:[#allocation2 + $0x40] sm:$0xff]
    %v207 = vld [vmem:[#allocation2 + $0x48] sm:$0xff]
    %v208 = vld [vmem:[#allocation2 + $0x50] sm:$0xff]
    %v209 = vld [vmem:[#allocation2 + $0x58] sm:$0xff]
    %v210 = vld [vmem:[#allocation2 + $0x60] sm:$0xff]
    %v211 = vld [vmem:[#allocation2 + $0x68] sm:$0xff]
    %v212 = vld [vmem:[#allocation2 + $0x70] sm:$0xff]
    %v213 = vld [vmem:[#allocation2 + $0x78] sm:$0xff]
    %v214 = vld [vmem:[#allocation2 + $0x80] sm:$0xff]
    %v215 = vld [vmem:[#allocation2 + $0x88] sm:$0xff]
    %v216 = vld [vmem:[#allocation2 + $0x90] sm:$0xff]
    %v217 = vld [vmem:[#allocation2 + $0x98] sm:$0xff]
    %v218 = vld [vmem:[#allocation2 + $0xa0] sm:$0xff]
    %v219 = vld [vmem:[#allocation2 + $0xa8] sm:$0xff]
    %v220 = vld [vmem:[#allocation2 + $0xb0] sm:$0xff]
    %v221 = vld [vmem:[#allocation2 + $0xb8] sm:$0xff]
    %v222 = vld [vmem:[#allocation2 + $0xc0] sm:$0xff]
    %v223 = vld [vmem:[#allocation2 + $0xc8] sm:$0xff]
    %v224 = vld [vmem:[#allocation2 + $0xd0] sm:$0xff]
    %v225 = vld [vmem:[#allocation2 + $0xd8] sm:$0xff]
    %v226 = vld [vmem:[#allocation2 + $0xe0] sm:$0xff]
    %v227 = vld [vmem:[#allocation2 + $0xe8] sm:$0xff]
    %v228 = vld [vmem:[#allocation2 + $0xf0] sm:$0xff]
    %v229 = vld [vmem:[#allocation2 + $0xf8] sm:$0xff]
    %v230 = vld [vmem:[#allocation2 + $0x100] sm:$0xff]
    %v231 = vld [vmem:[#allocation2 + $0x108] sm:$0xff]
    %v232 = vld [vmem:[#allocation2 + $0x110] sm:$0xff]
    %v233 = vld [vmem:[#allocation2 + $0x118] sm:$0xff]
    %v234 = vld [vmem:[#allocation2 + $0x120] sm:$0xff]
    %v235 = vld [vmem:[#allocation2 + $0x128] sm:$0xff]
    %v236 = vld [vmem:[#allocation2 + $0x130] sm:$0xff]
    %v237 = vld [vmem:[#allocation2 + $0x138] sm:$0xff]
    %v238 = vld [vmem:[#allocation2 + $0x140] sm:$0xff]
    %v239 = vld [vmem:[#allocation2 + $0x148] sm:$0xff]
    %v240 = vld [vmem:[#allocation2 + $0x150] sm:$0xff]
    %v241 = vld [vmem:[#allocation2 + $0x158] sm:$0xff]
    %v242 = vld [vmem:[#allocation2 + $0x160] sm:$0xff]
    %v243 = vld [vmem:[#allocation2 + $0x168] sm:$0xff]
    %v244 = vld [vmem:[#allocation2 + $0x170] sm:$0xff]
    %v245 = vld [vmem:[#allocation2 + $0x178] sm:$0xff]
    %246 = vmatprep.subr.mxu0 0.0
    %247 = vmatpush1.msra.mxu0 %v198
    %248 = vmatprep.subr.mxu0 0.0
    %249 = vmatpush1.msra.mxu0 %v199
    %250 = vmatprep.subr.mxu0 0.0
    %251 = vmatpush1.msra.mxu0 %v200
    %252 = vmatprep.subr.mxu0 0.0
    %253 = vmatpush1.msra.mxu0 %v201
    %254 = vmatprep.subr.mxu0 0.0
    %255 = vmatpush1.msra.mxu0 %v202
    %256 = vmatprep.subr.mxu0 0.0
    %257 = vmatpush1.msra.mxu0 %v203
    %258 = vmatprep.subr.mxu0 0.0
    %259 = vmatpush1.msra.mxu0 %v204
    %260 = vmatprep.subr.mxu0 0.0
    %261 = vmatpush1.msra.mxu0 %v205
    %262 = vmatprep.subr.mxu0 0.0
    %263 = vmatpush1.msra.mxu0 %v206
    %264 = vmatprep.subr.mxu0 0.0
    %265 = vmatpush1.msra.mxu0 %v207
    %266 = vmatprep.subr.mxu0 0.0
    %267 = vmatpush1.msra.mxu0 %v208
    %268 = vmatprep.subr.mxu0 0.0
    %269 = vmatpush1.msra.mxu0 %v209
    %270 = vmatprep.subr.mxu0 0.0
    %271 = vmatpush1.msra.mxu0 %v210
    %272 = vmatprep.subr.mxu0 0.0
    %273 = vmatpush1.msra.mxu0 %v211
    %274 = vmatprep.subr.mxu0 0.0
    %275 = vmatpush1.msra.mxu0 %v212
    %276 = vmatprep.subr.mxu0 0.0
    %277 = vmatpush1.msra.mxu0 %v213
    %278 = vmatprep.subr.mxu0 0.0
    %279 = vmatpush1.msra.mxu0 %v214
    %280 = vmatprep.subr.mxu0 0.0
    %281 = vmatpush1.msra.mxu0 %v215
    %282 = vmatprep.subr.mxu0 0.0
    %283 = vmatpush1.msra.mxu0 %v216
    %284 = vmatprep.subr.mxu0 0.0
    %285 = vmatpush1.msra.mxu0 %v217
    %286 = vmatprep.subr.mxu0 0.0
    %287 = vmatpush1.msra.mxu0 %v218
    %288 = vmatprep.subr.mxu0 0.0
    %289 = vmatpush1.msra.mxu0 %v219
    %290 = vmatprep.subr.mxu0 0.0
    %291 = vmatpush1.msra.mxu0 %v220
    %292 = vmatprep.subr.mxu0 0.0
    %293 = vmatpush1.msra.mxu0 %v221
    %294 = vmatprep.subr.mxu0 0.0
    %295 = vmatpush1.msra.mxu0 %v222
    %296 = vmatprep.subr.mxu0 0.0
    %297 = vmatpush1.msra.mxu0 %v223
    %298 = vmatprep.subr.mxu0 0.0
    %299 = vmatpush1.msra.mxu0 %v224
    %300 = vmatprep.subr.mxu0 0.0
    %301 = vmatpush1.msra.mxu0 %v225
    %302 = vmatprep.subr.mxu0 0.0
    %303 = vmatpush1.msra.mxu0 %v226
    %304 = vmatprep.subr.mxu0 0.0
    %305 = vmatpush1.msra.mxu0 %v227
    %306 = vmatprep.subr.mxu0 0.0
    %307 = vmatpush1.msra.mxu0 %v228
    %308 = vmatprep.subr.mxu0 0.0
    %309 = vmatpush1.msra.mxu0 %v229
    %310 = vmatprep.mubr.f32.mxu0 %v38
    %311 = vmatmul.mubr.f32.gmra.mrb[0].mxu0 %v160
    %v312 = vpop.f32.mrb[0].mxu0
    %v313 = vadd.f32 0.0, %v312
    %v314 = vpop.f32.mrb[0].mxu0
    %315 = vmatprep.mubr.f32.mxu0 %v39
    %316 = vmatmul.mubr.f32.gmra.mrb[0].mxu0 %v165
    %v317 = vpop.f32.mrb[0].mxu0
    %v318 = vadd.f32 0.0, %v317
    %v319 = vpop.f32.mrb[0].mxu0
    %320 = vmatprep.mubr.f32.mxu0 %v40
    %321 = vmatmul.mubr.f32.gmra.mrb[0].mxu0 %v170
    %v322 = vpop.f32.mrb[0].mxu0
    %v323 = vadd.f32 0.0, %v322
    %v324 = vpop.f32.mrb[0].mxu0
    %325 = vmatprep.mubr.f32.mxu0 %v41
    %326 = vmatmul.mubr.f32.gmra.mrb[0].mxu0 %v175
    %v327 = vpop.f32.mrb[0].mxu0
    %v328 = vadd.f32 0.0, %v327
    %v329 = vpop.f32.mrb[0].mxu0
    %330 = vdwg.mxu0
    %331 = vmatprep.subr.mxu0 0.0
    %332 = vmatpush1.msra.mxu0 %v230
    %333 = vmatprep.subr.mxu0 0.0
    %334 = vmatpush1.msra.mxu0 %v231
    %335 = vmatprep.subr.mxu0 0.0
    %336 = vmatpush1.msra.mxu0 %v232
    %337 = vmatprep.subr.mxu0 0.0
    %338 = vmatpush1.msra.mxu0 %v233
    %339 = vmatprep.subr.mxu0 0.0
    %340 = vmatpush1.msra.mxu0 %v234
    %341 = vmatprep.subr.mxu0 0.0
    %342 = vmatpush1.msra.mxu0 %v235
    %343 = vmatprep.subr.mxu0 0.0
    %344 = vmatpush1.msra.mxu0 %v236
    %345 = vmatprep.subr.mxu0 0.0
    %346 = vmatpush1.msra.mxu0 %v237
    %347 = vmatprep.subr.mxu0 0.0
    %348 = vmatpush1.msra.mxu0 %v238
    %349 = vmatprep.subr.mxu0 0.0
    %350 = vmatpush1.msra.mxu0 %v239
    %351 = vmatprep.subr.mxu0 0.0
    %352 = vmatpush1.msra.mxu0 %v240
    %353 = vmatprep.subr.mxu0 0.0
    %354 = vmatpush1.msra.mxu0 %v241
    %355 = vmatprep.subr.mxu0 0.0
    %356 = vmatpush1.msra.mxu0 %v242
    %357 = vmatprep.subr.mxu0 0.0
    %358 = vmatpush1.msra.mxu0 %v243
    %359 = vmatprep.subr.mxu0 0.0
    %360 = vmatpush1.msra.mxu0 %v244
    %361 = vmatprep.subr.mxu0 0.0
    %362 = vmatpush1.msra.mxu0 %v245
    %363 = vmatprep.subr.mxu0 0.0
    %364 = vmatpush1.msra.mxu0 0.0
    %365 = vmatprep.subr.mxu0 0.0
    %366 = vmatpush1.msra.mxu0 0.0
    %367 = vmatprep.subr.mxu0 0.0
    %368 = vmatpush1.msra.mxu0 0.0
    %369 = vmatprep.subr.mxu0 0.0
    %370 = vmatpush1.msra.mxu0 0.0
    %371 = vmatprep.subr.mxu0 0.0
    %372 = vmatpush1.msra.mxu0 0.0
    %373 = vmatprep.subr.mxu0 0.0
    %374 = vmatpush1.msra.mxu0 0.0
    %375 = vmatprep.subr.mxu0 0.0
    %376 = vmatpush1.msra.mxu0 0.0
    %377 = vmatprep.subr.mxu0 0.0
    %378 = vmatpush1.msra.mxu0 0.0
    %379 = vmatprep.subr.mxu0 0.0
    %380 = vmatpush1.msra.mxu0 0.0
    %381 = vmatprep.subr.mxu0 0.0
    %382 = vmatpush1.msra.mxu0 0.0
    %383 = vmatprep.subr.mxu0 0.0
    %384 = vmatpush1.msra.mxu0 0.0
    %385 = vmatprep.subr.mxu0 0.0
    %386 = vmatpush1.msra.mxu0 0.0
    %387 = vmatprep.subr.mxu0 0.0
    %388 = vmatpush1.msra.mxu0 0.0
    %389 = vmatprep.subr.mxu0 0.0
    %390 = vmatpush1.msra.mxu0 0.0
    %391 = vmatprep.subr.mxu0 0.0
    %392 = vmatpush1.msra.mxu0 0.0
    %393 = vmatprep.subr.mxu0 0.0
    %394 = vmatpush1.msra.mxu0 0.0
    %395 = vmatprep.mubr.f32.mxu0 0.0
    %396 = vmatmul.mubr.f32.gmra.mrb[0].mxu0 %v180
    %v397 = vpop.f32.mrb[0].mxu0
    %v398 = vadd.f32 %v313, %v397
    %v399 = vpop.f32.mrb[0].mxu0
    %400 = vmatprep.mubr.f32.mxu0 0.0
    %401 = vmatmul.mubr.f32.gmra.mrb[0].mxu0 %v185
    %v402 = vpop.f32.mrb[0].mxu0
    %v403 = vadd.f32 %v318, %v402
    %v404 = vpop.f32.mrb[0].mxu0
    %405 = vmatprep.mubr.f32.mxu0 0.0
    %406 = vmatmul.mubr.f32.gmra.mrb[0].mxu0 %v190
    %v407 = vpop.f32.mrb[0].mxu0
    %v408 = vadd.f32 %v323, %v407
    %v409 = vpop.f32.mrb[0].mxu0
    %410 = vmatprep.mubr.f32.mxu0 0.0
    %411 = vmatmul.mubr.f32.gmra.mrb[0].mxu0 %v195
    %v412 = vpop.f32.mrb[0].mxu0
    %v413 = vadd.f32 %v328, %v412
    %v414 = vpop.f32.mrb[0].mxu0
    %415 = vdwg.mxu0
    %v416 = vadd.f32 %v398, %v403
    %v417 = vadd.f32 %v416, %v408
    %v418 = vadd.f32 %v417, %v413
    %v419 = vrot.slane %v418, 4
    %v420 = vadd.f32 %v418, %v419
    %v421 = vrot.slane %v420, 2
    %v422 = vadd.f32 %v420, %v421
    %v423 = vrot.slane %v422, 1
    %v424 = vadd.f32 %v422, %v423
    %v425 = vmul.f32 %v398, %v398
    %v426 = vmul.f32 %v403, %v403
    %v427 = vmul.f32 %v408, %v408
    %v428 = vmul.f32 %v413, %v413
    %v429 = vadd.f32 %v425, %v426
    %v430 = vadd.f32 %v429, %v427
    %v431 = vadd.f32 %v430, %v428
    %v432 = vrot.slane %v431, 4
    %v433 = vadd.f32 %v431, %v432
    %v434 = vrot.slane %v433, 2
    %v435 = vadd.f32 %v433, %v434
    %v436 = vrot.slane %v435, 1
    %v437 = vadd.f32 %v435, %v436
    %vm438 = vcmask 1040384
    %v439 = vsel %vm438, %v424, %v437
    %440 = vmatprep.subr.mxu0 0.0
    %441 = vmatpush1.msra.mxu0 %v50
    %442 = vmatprep.subr.mxu0 0.0
    %443 = vmatpush1.msra.mxu0 %v51
    %444 = vmatprep.subr.mxu0 0.0
    %445 = vmatpush1.msra.mxu0 %v52
    %446 = vmatprep.subr.mxu0 0.0
    %447 = vmatpush1.msra.mxu0 %v53
    %448 = vmatprep.subr.mxu0 0.0
    %449 = vmatpush1.msra.mxu0 %v54
    %450 = vmatprep.subr.mxu0 0.0
    %451 = vmatpush1.msra.mxu0 %v55
    %452 = vmatprep.subr.mxu0 0.0
    %453 = vmatpush1.msra.mxu0 %v56
    %454 = vmatprep.subr.mxu0 0.0
    %455 = vmatpush1.msra.mxu0 %v57
    %456 = vmatprep.subr.mxu0 0.0
    %457 = vmatpush1.msra.mxu0 %v58
    %458 = vmatprep.subr.mxu0 0.0
    %459 = vmatpush1.msra.mxu0 %v59
    %460 = vmatprep.subr.mxu0 0.0
    %461 = vmatpush1.msra.mxu0 %v60
    %462 = vmatprep.subr.mxu0 0.0
    %463 = vmatpush1.msra.mxu0 %v61
    %464 = vmatprep.subr.mxu0 0.0
    %465 = vmatpush1.msra.mxu0 %v62
    %466 = vmatprep.subr.mxu0 0.0
    %467 = vmatpush1.msra.mxu0 %v63
    %468 = vmatprep.subr.mxu0 0.0
    %469 = vmatpush1.msra.mxu0 %v64
    %470 = vmatprep.subr.mxu0 0.0
    %471 = vmatpush1.msra.mxu0 %v65
    %472 = vmatprep.subr.mxu0 0.0
    %473 = vmatpush1.msra.mxu0 0.0
    %474 = vmatprep.subr.mxu0 0.0
    %475 = vmatpush1.msra.mxu0 0.0
    %476 = vmatprep.subr.mxu0 0.0
    %477 = vmatpush1.msra.mxu0 0.0
    %478 = vmatprep.subr.mxu0 0.0
    %479 = vmatpush1.msra.mxu0 0.0
    %480 = vmatprep.subr.mxu0 0.0
    %481 = vmatpush1.msra.mxu0 0.0
    %482 = vmatprep.subr.mxu0 0.0
    %483 = vmatpush1.msra.mxu0 0.0
    %484 = vmatprep.subr.mxu0 0.0
    %485 = vmatpush1.msra.mxu0 0.0
    %486 = vmatprep.subr.mxu0 0.0
    %487 = vmatpush1.msra.mxu0 0.0
    %488 = vmatprep.subr.mxu0 0.0
    %489 = vmatpush1.msra.mxu0 0.0
    %490 = vmatprep.subr.mxu0 0.0
    %491 = vmatpush1.msra.mxu0 0.0
    %492 = vmatprep.subr.mxu0 0.0
    %493 = vmatpush1.msra.mxu0 0.0
    %494 = vmatprep.subr.mxu0 0.0
    %495 = vmatpush1.msra.mxu0 0.0
    %496 = vmatprep.subr.mxu0 0.0
    %497 = vmatpush1.msra.mxu0 0.0
    %498 = vmatprep.subr.mxu0 0.0
    %499 = vmatpush1.msra.mxu0 0.0
    %500 = vmatprep.subr.mxu0 0.0
    %501 = vmatpush1.msra.mxu0 0.0
    %502 = vmatprep.subr.mxu0 0.0
    %503 = vmatpush1.msra.mxu0 0.0
    %504 = vmatprep.mubr.f32.mxu0 0.0
    %505 = vmatmul.mubr.f32.gmra.mrb[0].mxu0 %v439
    %v506 = vpop.f32.mrb[0].mxu0
    %v507 = vadd.f32 0.0, %v506
    %v508 = vpop.f32.mrb[0].mxu0
    %509 = vdwg.mxu0
    %v510 = vmul.f32 %v507, 0.001953125
    %v511 = vmul.f32 %v510, %v510
    %v513 = vrot.slane %v511, 7
    %v515 = vsub.f32 %v510, %v513
    %v516 = vadd.f32 %v515, 1e-05
    %v517 = vrsqrt.pop %v516
    %v519 = vrot.slane %v517, 1
    %v521 = vmul.f32 %v67, %v519
    %v522 = vmul.f32 %v510, %v521
    %v524 = vrot.slane %v522, 7
    %v526 = vsub.f32 %v67, %v524
    %v527 = vsel %vm438, %v521, %v526
    %vm528 = vcmask 64512
    %v530 = vsel %vm528, %v527, 0
    %532 = vmatprep.subr.mxu0 0.0
    %533 = vmatpush1.msra.mxu0 %v66
    %534 = vmatprep.subr.mxu0 0.0
    %535 = vmatpush1.msra.mxu0 0.0
    %536 = vmatprep.subr.mxu0 0.0
    %537 = vmatpush1.msra.mxu0 0.0
    %538 = vmatprep.subr.mxu0 0.0
    %539 = vmatpush1.msra.mxu0 0.0
    %540 = vmatprep.subr.mxu0 0.0
    %541 = vmatpush1.msra.mxu0 0.0
    %542 = vmatprep.subr.mxu0 0.0
    %543 = vmatpush1.msra.mxu0 0.0
    %544 = vmatprep.subr.mxu0 0.0
    %545 = vmatpush1.msra.mxu0 0.0
    %546 = vmatprep.subr.mxu0 0.0
    %547 = vmatpush1.msra.mxu0 0.0
    %548 = vmatprep.subr.mxu0 0.0
    %549 = vmatpush1.msra.mxu0 0.0
    %550 = vmatprep.subr.mxu0 0.0
    %551 = vmatpush1.msra.mxu0 0.0
    %552 = vmatprep.subr.mxu0 0.0
    %553 = vmatpush1.msra.mxu0 0.0
    %554 = vmatprep.subr.mxu0 0.0
    %555 = vmatpush1.msra.mxu0 0.0
    %556 = vmatprep.subr.mxu0 0.0
    %557 = vmatpush1.msra.mxu0 0.0
    %558 = vmatprep.subr.mxu0 0.0
    %559 = vmatpush1.msra.mxu0 0.0
    %560 = vmatprep.subr.mxu0 0.0
    %561 = vmatpush1.msra.mxu0 0.0
    %562 = vmatprep.subr.mxu0 0.0
    %563 = vmatpush1.msra.mxu0 0.0
    %564 = vmatprep.subr.mxu0 0.0
    %565 = vmatpush1.msra.mxu0 0.0
    %566 = vmatprep.subr.mxu0 0.0
    %567 = vmatpush1.msra.mxu0 0.0
    %568 = vmatprep.subr.mxu0 0.0
    %569 = vmatpush1.msra.mxu0 0.0
    %570 = vmatprep.subr.mxu0 0.0
    %571 = vmatpush1.msra.mxu0 0.0
    %572 = vmatprep.subr.mxu0 0.0
    %573 = vmatpush1.msra.mxu0 0.0
    %574 = vmatprep.subr.mxu0 0.0
    %575 = vmatpush1.msra.mxu0 0.0
    %576 = vmatprep.subr.mxu0 0.0
    %577 = vmatpush1.msra.mxu0 0.0
    %578 = vmatprep.subr.mxu0 0.0
    %579 = vmatpush1.msra.mxu0 0.0
    %580 = vmatprep.subr.mxu0 0.0
    %581 = vmatpush1.msra.mxu0 0.0
    %582 = vmatprep.subr.mxu0 0.0
    %583 = vmatpush1.msra.mxu0 0.0
    %584 = vmatprep.subr.mxu0 0.0
    %585 = vmatpush1.msra.mxu0 0.0
    %586 = vmatprep.subr.mxu0 0.0
    %587 = vmatpush1.msra.mxu0 0.0
    %588 = vmatprep.subr.mxu0 0.0
    %589 = vmatpush1.msra.mxu0 0.0
    %590 = vmatprep.subr.mxu0 0.0
    %591 = vmatpush1.msra.mxu0 0.0
    %592 = vmatprep.subr.mxu0 0.0
    %593 = vmatpush1.msra.mxu0 0.0
    %594 = vmatprep.subr.mxu0 0.0
    %595 = vmatpush1.msra.mxu0 0.0
    %596 = vmatprep.mubr.f32.mxu0 0.0
    %597 = vmatmul.mubr.f32.gmra.mrb[0].mxu0 %v530
    %v598 = vpop.f32.mrb[0].mxu0
    %v599 = vadd.f32 0.0, %v598
    %v600 = vpop.f32.mrb[0].mxu0
    %601 = vdwg.mxu0
    %v602 = vlaneseq
    %v603 = vshrl.u32 %v602, 7
    %v604 = vsub.s32 0, %v603
    %v605 = vrot.slane %v599, %v604
    %v606 = vmul.f32 %v398, %v605
    %v607 = vmul.f32 %v403, %v605
    %v608 = vmul.f32 %v408, %v605
    %v609 = vmul.f32 %v413, %v605
    %v610 = vlaneseq
    %v611 = vshrl.u32 %v610, 7
    %v612 = vsub.s32 1, %v611
    %v613 = vrot.slane %v599, %v612
    %v614 = vadd.f32 %v606, %v613
    %v615 = vadd.f32 %v607, %v613
    %v616 = vadd.f32 %v608, %v613
    %v617 = vadd.f32 %v609, %v613
    %v618 = vmax.f32 %v614, 0.0
    %v619 = vmax.f32 %v615, 0.0
    %v620 = vmax.f32 %v616, 0.0
    %v621 = vmax.f32 %v617, 0.0
    %622 = vmatprep.subr.mxu0 0.0
    %623 = vmatpush1.msra.mxu0 %v618
    %624 = vmatprep.subr.mxu0 0.0
    %625 = vmatpush1.msra.mxu0 %v619
    %626 = vmatprep.subr.mxu0 0.0
    %627 = vmatpush1.msra.mxu0 %v620
    %628 = vmatprep.subr.mxu0 0.0
    %629 = vmatpush1.msra.mxu0 %v621
    %630 = vmatprep.subr.mxu0 0.0
    %631 = vmatpush1.msra.mxu0 0.0
    %632 = vmatprep.subr.mxu0 0.0
    %633 = vmatpush1.msra.mxu0 0.0
    %634 = vmatprep.subr.mxu0 0.0
    %635 = vmatpush1.msra.mxu0 0.0
    %636 = vmatprep.subr.mxu0 0.0
    %637 = vmatpush1.msra.mxu0 0.0
    %638 = vmatprep.subr.mxu0 0.0
    %639 = vmatpush1.msra.mxu0 0.0
    %640 = vmatprep.subr.mxu0 0.0
    %641 = vmatpush1.msra.mxu0 0.0
    %642 = vmatprep.subr.mxu0 0.0
    %643 = vmatpush1.msra.mxu0 0.0
    %644 = vmatprep.subr.mxu0 0.0
    %645 = vmatpush1.msra.mxu0 0.0
    %646 = vmatprep.subr.mxu0 0.0
    %647 = vmatpush1.msra.mxu0 0.0
    %648 = vmatprep.subr.mxu0 0.0
    %649 = vmatpush1.msra.mxu0 0.0
    %650 = vmatprep.subr.mxu0 0.0
    %651 = vmatpush1.msra.mxu0 0.0
    %652 = vmatprep.subr.mxu0 0.0
    %653 = vmatpush1.msra.mxu0 0.0
    %654 = vmatprep.subr.mxu0 0.0
    %655 = vmatpush1.msra.mxu0 0.0
    %656 = vmatprep.subr.mxu0 0.0
    %657 = vmatpush1.msra.mxu0 0.0
    %658 = vmatprep.subr.mxu0 0.0
    %659 = vmatpush1.msra.mxu0 0.0
    %660 = vmatprep.subr.mxu0 0.0
    %661 = vmatpush1.msra.mxu0 0.0
    %662 = vmatprep.subr.mxu0 0.0
    %663 = vmatpush1.msra.mxu0 0.0
    %664 = vmatprep.subr.mxu0 0.0
    %665 = vmatpush1.msra.mxu0 0.0
    %666 = vmatprep.subr.mxu0 0.0
    %667 = vmatpush1.msra.mxu0 0.0
    %668 = vmatprep.subr.mxu0 0.0
    %669 = vmatpush1.msra.mxu0 0.0
    %670 = vmatprep.subr.mxu0 0.0
    %671 = vmatpush1.msra.mxu0 0.0
    %672 = vmatprep.subr.mxu0 0.0
    %673 = vmatpush1.msra.mxu0 0.0
    %674 = vmatprep.subr.mxu0 0.0
    %675 = vmatpush1.msra.mxu0 0.0
    %676 = vmatprep.subr.mxu0 0.0
    %677 = vmatpush1.msra.mxu0 0.0
    %678 = vmatprep.subr.mxu0 0.0
    %679 = vmatpush1.msra.mxu0 0.0
    %680 = vmatprep.subr.mxu0 0.0
    %681 = vmatpush1.msra.mxu0 0.0
    %682 = vmatprep.subr.mxu0 0.0
    %683 = vmatpush1.msra.mxu0 0.0
    %684 = vmatprep.subr.mxu0 0.0
    %685 = vmatpush1.msra.mxu0 0.0
    %686 = vmatprep.mubr.f32.mxu0 0.0
    %687 = vmatmul.mubr.f32.gmra.mrb[0].mxu0 %v70
    %v688 = vpop.f32.mrb[0].mxu0
    %v689 = vadd.f32 0.0, %v688
    %v690 = vpop.f32.mrb[0].mxu0
    %691 = vmatprep.mubr.f32.mxu0 0.0
    %692 = vmatmul.mubr.f32.gmra.mrb[0].mxu0 %v73
    %v693 = vpop.f32.mrb[0].mxu0
    %v694 = vadd.f32 0.0, %v693
    %v695 = vpop.f32.mrb[0].mxu0
    %696 = vmatprep.mubr.f32.mxu0 0.0
    %697 = vmatmul.mubr.f32.gmra.mrb[0].mxu0 %v76
    %v698 = vpop.f32.mrb[0].mxu0
    %v699 = vadd.f32 0.0, %v698
    %v700 = vpop.f32.mrb[0].mxu0
    %701 = vmatprep.mubr.f32.mxu0 0.0
    %702 = vmatmul.mubr.f32.gmra.mrb[0].mxu0 %v79
    %v703 = vpop.f32.mrb[0].mxu0
    %v704 = vadd.f32 0.0, %v703
    %v705 = vpop.f32.mrb[0].mxu0
    %706 = vmatprep.mubr.f32.mxu0 0.0
    %707 = vmatmul.mubr.f32.gmra.mrb[0].mxu0 %v82
    %v708 = vpop.f32.mrb[0].mxu0
    %v709 = vadd.f32 0.0, %v708
    %v710 = vpop.f32.mrb[0].mxu0
    %711 = vmatprep.mubr.f32.mxu0 0.0
    %712 = vmatmul.mubr.f32.gmra.mrb[0].mxu0 %v85
    %v713 = vpop.f32.mrb[0].mxu0
    %v714 = vadd.f32 0.0, %v713
    %v715 = vpop.f32.mrb[0].mxu0
    %716 = vmatprep.mubr.f32.mxu0 0.0
    %717 = vmatmul.mubr.f32.gmra.mrb[0].mxu0 %v88
    %v718 = vpop.f32.mrb[0].mxu0
    %v719 = vadd.f32 0.0, %v718
    %v720 = vpop.f32.mrb[0].mxu0
    %721 = vmatprep.mubr.f32.mxu0 0.0
    %722 = vmatmul.mubr.f32.gmra.mrb[0].mxu0 %v91
    %v723 = vpop.f32.mrb[0].mxu0
    %v724 = vadd.f32 0.0, %v723
    %v725 = vpop.f32.mrb[0].mxu0
    %726 = vdwg.mxu0
    %s727 = scalar_lea.vmem [#allocation2], 384
    %v728 = vld [vmem:[%s727] sm:$0xff]
    %v729 = vld [vmem:[%s727 + $0x8] sm:$0xff]
    %v730 = vld [vmem:[%s727 + $0x10] sm:$0xff]
    %v731 = vld [vmem:[%s727 + $0x18] sm:$0xff]
    %v732 = vld [vmem:[%s727 + $0x20] sm:$0xff]
    %v733 = vld [vmem:[%s727 + $0x28] sm:$0xff]
    %v734 = vld [vmem:[%s727 + $0x30] sm:$0xff]
    %v735 = vld [vmem:[%s727 + $0x38] sm:$0xff]
    %v736 = vld [vmem:[%s727 + $0x40] sm:$0xff]
    %v737 = vld [vmem:[%s727 + $0x48] sm:$0xff]
    %v738 = vld [vmem:[%s727 + $0x50] sm:$0xff]
    %v739 = vld [vmem:[%s727 + $0x58] sm:$0xff]
    %v740 = vld [vmem:[%s727 + $0x60] sm:$0xff]
    %v741 = vld [vmem:[%s727 + $0x68] sm:$0xff]
    %v742 = vld [vmem:[%s727 + $0x70] sm:$0xff]
    %v743 = vld [vmem:[%s727 + $0x78] sm:$0xff]
    %v744 = vld [vmem:[%s727 + $0x80] sm:$0xff]
    %v745 = vld [vmem:[%s727 + $0x88] sm:$0xff]
    %v746 = vld [vmem:[%s727 + $0x90] sm:$0xff]
    %v747 = vld [vmem:[%s727 + $0x98] sm:$0xff]
    %v748 = vld [vmem:[%s727 + $0xa0] sm:$0xff]
    %v749 = vld [vmem:[%s727 + $0xa8] sm:$0xff]
    %v750 = vld [vmem:[%s727 + $0xb0] sm:$0xff]
    %v751 = vld [vmem:[%s727 + $0xb8] sm:$0xff]
    %v752 = vld [vmem:[%s727 + $0xc0] sm:$0xff]
    %v753 = vld [vmem:[%s727 + $0xc8] sm:$0xff]
    %v754 = vld [vmem:[%s727 + $0xd0] sm:$0xff]
    %v755 = vld [vmem:[%s727 + $0xd8] sm:$0xff]
    %v756 = vld [vmem:[%s727 + $0xe0] sm:$0xff]
    %v757 = vld [vmem:[%s727 + $0xe8] sm:$0xff]
    %v758 = vld [vmem:[%s727 + $0xf0] sm:$0xff]
    %v759 = vld [vmem:[%s727 + $0xf8] sm:$0xff]
    %v760 = vld [vmem:[%s727 + $0x100] sm:$0xff]
    %v761 = vld [vmem:[%s727 + $0x108] sm:$0xff]
    %v762 = vld [vmem:[%s727 + $0x110] sm:$0xff]
    %v763 = vld [vmem:[%s727 + $0x118] sm:$0xff]
    %v764 = vld [vmem:[%s727 + $0x120] sm:$0xff]
    %v765 = vld [vmem:[%s727 + $0x128] sm:$0xff]
    %v766 = vld [vmem:[%s727 + $0x130] sm:$0xff]
    %v767 = vld [vmem:[%s727 + $0x138] sm:$0xff]
    %v768 = vld [vmem:[%s727 + $0x140] sm:$0xff]
    %v769 = vld [vmem:[%s727 + $0x148] sm:$0xff]
    %v770 = vld [vmem:[%s727 + $0x150] sm:$0xff]
    %v771 = vld [vmem:[%s727 + $0x158] sm:$0xff]
    %v772 = vld [vmem:[%s727 + $0x160] sm:$0xff]
    %v773 = vld [vmem:[%s727 + $0x168] sm:$0xff]
    %v774 = vld [vmem:[%s727 + $0x170] sm:$0xff]
    %v775 = vld [vmem:[%s727 + $0x178] sm:$0xff]
    %776 = vmatprep.subr.mxu0 0.0
    %777 = vmatpush1.msra.mxu0 %v728
    %778 = vmatprep.subr.mxu0 0.0
    %779 = vmatpush1.msra.mxu0 %v729
    %780 = vmatprep.subr.mxu0 0.0
    %781 = vmatpush1.msra.mxu0 %v730
    %782 = vmatprep.subr.mxu0 0.0
    %783 = vmatpush1.msra.mxu0 %v731
    %784 = vmatprep.subr.mxu0 0.0
    %785 = vmatpush1.msra.mxu0 %v732
    %786 = vmatprep.subr.mxu0 0.0
    %787 = vmatpush1.msra.mxu0 %v733
    %788 = vmatprep.subr.mxu0 0.0
    %789 = vmatpush1.msra.mxu0 %v734
    %790 = vmatprep.subr.mxu0 0.0
    %791 = vmatpush1.msra.mxu0 %v735
    %792 = vmatprep.subr.mxu0 0.0
    %793 = vmatpush1.msra.mxu0 %v736
    %794 = vmatprep.subr.mxu0 0.0
    %795 = vmatpush1.msra.mxu0 %v737
    %796 = vmatprep.subr.mxu0 0.0
    %797 = vmatpush1.msra.mxu0 %v738
    %798 = vmatprep.subr.mxu0 0.0
    %799 = vmatpush1.msra.mxu0 %v739
    %800 = vmatprep.subr.mxu0 0.0
    %801 = vmatpush1.msra.mxu0 %v740
    %802 = vmatprep.subr.mxu0 0.0
    %803 = vmatpush1.msra.mxu0 %v741
    %804 = vmatprep.subr.mxu0 0.0
    %805 = vmatpush1.msra.mxu0 %v742
    %806 = vmatprep.subr.mxu0 0.0
    %807 = vmatpush1.msra.mxu0 %v743
    %808 = vmatprep.subr.mxu0 0.0
    %809 = vmatpush1.msra.mxu0 %v744
    %810 = vmatprep.subr.mxu0 0.0
    %811 = vmatpush1.msra.mxu0 %v745
    %812 = vmatprep.subr.mxu0 0.0
    %813 = vmatpush1.msra.mxu0 %v746
    %814 = vmatprep.subr.mxu0 0.0
    %815 = vmatpush1.msra.mxu0 %v747
    %816 = vmatprep.subr.mxu0 0.0
    %817 = vmatpush1.msra.mxu0 %v748
    %818 = vmatprep.subr.mxu0 0.0
    %819 = vmatpush1.msra.mxu0 %v749
    %820 = vmatprep.subr.mxu0 0.0
    %821 = vmatpush1.msra.mxu0 %v750
    %822 = vmatprep.subr.mxu0 0.0
    %823 = vmatpush1.msra.mxu0 %v751
    %824 = vmatprep.subr.mxu0 0.0
    %825 = vmatpush1.msra.mxu0 %v752
    %826 = vmatprep.subr.mxu0 0.0
    %827 = vmatpush1.msra.mxu0 %v753
    %828 = vmatprep.subr.mxu0 0.0
    %829 = vmatpush1.msra.mxu0 %v754
    %830 = vmatprep.subr.mxu0 0.0
    %831 = vmatpush1.msra.mxu0 %v755
    %832 = vmatprep.subr.mxu0 0.0
    %833 = vmatpush1.msra.mxu0 %v756
    %834 = vmatprep.subr.mxu0 0.0
    %835 = vmatpush1.msra.mxu0 %v757
    %836 = vmatprep.subr.mxu0 0.0
    %837 = vmatpush1.msra.mxu0 %v758
    %838 = vmatprep.subr.mxu0 0.0
    %839 = vmatpush1.msra.mxu0 %v759
    %840 = vmatprep.mubr.f32.mxu0 %v618
    %841 = vmatmul.mubr.f32.gmra.mrb[0].mxu0 %v689
    %v842 = vpop.f32.mrb[0].mxu0
    %v843 = vadd.f32 0.0, %v842
    %v844 = vpop.f32.mrb[0].mxu0
    %845 = vmatprep.mubr.f32.mxu0 %v619
    %846 = vmatmul.mubr.f32.gmra.mrb[0].mxu0 %v694
    %v847 = vpop.f32.mrb[0].mxu0
    %v848 = vadd.f32 0.0, %v847
    %v849 = vpop.f32.mrb[0].mxu0
    %850 = vmatprep.mubr.f32.mxu0 %v620
    %851 = vmatmul.mubr.f32.gmra.mrb[0].mxu0 %v699
    %v852 = vpop.f32.mrb[0].mxu0
    %v853 = vadd.f32 0.0, %v852
    %v854 = vpop.f32.mrb[0].mxu0
    %855 = vmatprep.mubr.f32.mxu0 %v621
    %856 = vmatmul.mubr.f32.gmra.mrb[0].mxu0 %v704
    %v857 = vpop.f32.mrb[0].mxu0
    %v858 = vadd.f32 0.0, %v857
    %v859 = vpop.f32.mrb[0].mxu0
    %860 = vdwg.mxu0
    %861 = vmatprep.subr.mxu0 0.0
    %862 = vmatpush1.msra.mxu0 %v760
    %863 = vmatprep.subr.mxu0 0.0
    %864 = vmatpush1.msra.mxu0 %v761
    %865 = vmatprep.subr.mxu0 0.0
    %866 = vmatpush1.msra.mxu0 %v762
    %867 = vmatprep.subr.mxu0 0.0
    %868 = vmatpush1.msra.mxu0 %v763
    %869 = vmatprep.subr.mxu0 0.0
    %870 = vmatpush1.msra.mxu0 %v764
    %871 = vmatprep.subr.mxu0 0.0
    %872 = vmatpush1.msra.mxu0 %v765
    %873 = vmatprep.subr.mxu0 0.0
    %874 = vmatpush1.msra.mxu0 %v766
    %875 = vmatprep.subr.mxu0 0.0
    %876 = vmatpush1.msra.mxu0 %v767
    %877 = vmatprep.subr.mxu0 0.0
    %878 = vmatpush1.msra.mxu0 %v768
    %879 = vmatprep.subr.mxu0 0.0
    %880 = vmatpush1.msra.mxu0 %v769
    %881 = vmatprep.subr.mxu0 0.0
    %882 = vmatpush1.msra.mxu0 %v770
    %883 = vmatprep.subr.mxu0 0.0
    %884 = vmatpush1.msra.mxu0 %v771
    %885 = vmatprep.subr.mxu0 0.0
    %886 = vmatpush1.msra.mxu0 %v772
    %887 = vmatprep.subr.mxu0 0.0
    %888 = vmatpush1.msra.mxu0 %v773
    %889 = vmatprep.subr.mxu0 0.0
    %890 = vmatpush1.msra.mxu0 %v774
    %891 = vmatprep.subr.mxu0 0.0
    %892 = vmatpush1.msra.mxu0 %v775
    %893 = vmatprep.subr.mxu0 0.0
    %894 = vmatpush1.msra.mxu0 0.0
    %895 = vmatprep.subr.mxu0 0.0
    %896 = vmatpush1.msra.mxu0 0.0
    %897 = vmatprep.subr.mxu0 0.0
    %898 = vmatpush1.msra.mxu0 0.0
    %899 = vmatprep.subr.mxu0 0.0
    %900 = vmatpush1.msra.mxu0 0.0
    %901 = vmatprep.subr.mxu0 0.0
    %902 = vmatpush1.msra.mxu0 0.0
    %903 = vmatprep.subr.mxu0 0.0
    %904 = vmatpush1.msra.mxu0 0.0
    %905 = vmatprep.subr.mxu0 0.0
    %906 = vmatpush1.msra.mxu0 0.0
    %907 = vmatprep.subr.mxu0 0.0
    %908 = vmatpush1.msra.mxu0 0.0
    %909 = vmatprep.subr.mxu0 0.0
    %910 = vmatpush1.msra.mxu0 0.0
    %911 = vmatprep.subr.mxu0 0.0
    %912 = vmatpush1.msra.mxu0 0.0
    %913 = vmatprep.subr.mxu0 0.0
    %914 = vmatpush1.msra.mxu0 0.0
    %915 = vmatprep.subr.mxu0 0.0
    %916 = vmatpush1.msra.mxu0 0.0
    %917 = vmatprep.subr.mxu0 0.0
    %918 = vmatpush1.msra.mxu0 0.0
    %919 = vmatprep.subr.mxu0 0.0
    %920 = vmatpush1.msra.mxu0 0.0
    %921 = vmatprep.subr.mxu0 0.0
    %922 = vmatpush1.msra.mxu0 0.0
    %923 = vmatprep.subr.mxu0 0.0
    %924 = vmatpush1.msra.mxu0 0.0
    %925 = vmatprep.mubr.f32.mxu0 0.0
    %926 = vmatmul.mubr.f32.gmra.mrb[0].mxu0 %v709
    %v927 = vpop.f32.mrb[0].mxu0
    %v928 = vadd.f32 %v843, %v927
    %v929 = vpop.f32.mrb[0].mxu0
    %930 = vmatprep.mubr.f32.mxu0 0.0
    %931 = vmatmul.mubr.f32.gmra.mrb[0].mxu0 %v714
    %v932 = vpop.f32.mrb[0].mxu0
    %v933 = vadd.f32 %v848, %v932
    %v934 = vpop.f32.mrb[0].mxu0
    %935 = vmatprep.mubr.f32.mxu0 0.0
    %936 = vmatmul.mubr.f32.gmra.mrb[0].mxu0 %v719
    %v937 = vpop.f32.mrb[0].mxu0
    %v938 = vadd.f32 %v853, %v937
    %v939 = vpop.f32.mrb[0].mxu0
    %940 = vmatprep.mubr.f32.mxu0 0.0
    %941 = vmatmul.mubr.f32.gmra.mrb[0].mxu0 %v724
    %v942 = vpop.f32.mrb[0].mxu0
    %v943 = vadd.f32 %v858, %v942
    %v944 = vpop.f32.mrb[0].mxu0
    %945 = vdwg.mxu0
    %v946 = vadd.f32 %v928, %v933
    %v947 = vadd.f32 %v946, %v938
    %v948 = vadd.f32 %v947, %v943
    %v949 = vrot.slane %v948, 4
    %v950 = vadd.f32 %v948, %v949
    %v951 = vrot.slane %v950, 2
    %v952 = vadd.f32 %v950, %v951
    %v953 = vrot.slane %v952, 1
    %v954 = vadd.f32 %v952, %v953
    %v955 = vmul.f32 %v928, %v928
    %v956 = vmul.f32 %v933, %v933
    %v957 = vmul.f32 %v938, %v938
    %v958 = vmul.f32 %v943, %v943
    %v959 = vadd.f32 %v955, %v956
    %v960 = vadd.f32 %v959, %v957
    %v961 = vadd.f32 %v960, %v958
    %v962 = vrot.slane %v961, 4
    %v963 = vadd.f32 %v961, %v962
    %v964 = vrot.slane %v963, 2
    %v965 = vadd.f32 %v963, %v964
    %v966 = vrot.slane %v965, 1
    %v967 = vadd.f32 %v965, %v966
    %v968 = vsel %vm438, %v954, %v967
    %969 = vmatprep.subr.mxu0 0.0
    %970 = vmatpush1.msra.mxu0 %v50
    %971 = vmatprep.subr.mxu0 0.0
    %972 = vmatpush1.msra.mxu0 %v51
    %973 = vmatprep.subr.mxu0 0.0
    %974 = vmatpush1.msra.mxu0 %v52
    %975 = vmatprep.subr.mxu0 0.0
    %976 = vmatpush1.msra.mxu0 %v53
    %977 = vmatprep.subr.mxu0 0.0
    %978 = vmatpush1.msra.mxu0 %v54
    %979 = vmatprep.subr.mxu0 0.0
    %980 = vmatpush1.msra.mxu0 %v55
    %981 = vmatprep.subr.mxu0 0.0
    %982 = vmatpush1.msra.mxu0 %v56
    %983 = vmatprep.subr.mxu0 0.0
    %984 = vmatpush1.msra.mxu0 %v57
    %985 = vmatprep.subr.mxu0 0.0
    %986 = vmatpush1.msra.mxu0 %v58
    %987 = vmatprep.subr.mxu0 0.0
    %988 = vmatpush1.msra.mxu0 %v59
    %989 = vmatprep.subr.mxu0 0.0
    %990 = vmatpush1.msra.mxu0 %v60
    %991 = vmatprep.subr.mxu0 0.0
    %992 = vmatpush1.msra.mxu0 %v61
    %993 = vmatprep.subr.mxu0 0.0
    %994 = vmatpush1.msra.mxu0 %v62
    %995 = vmatprep.subr.mxu0 0.0
    %996 = vmatpush1.msra.mxu0 %v63
    %997 = vmatprep.subr.mxu0 0.0
    %998 = vmatpush1.msra.mxu0 %v64
    %999 = vmatprep.subr.mxu0 0.0
    %1000 = vmatpush1.msra.mxu0 %v65
    %1001 = vmatprep.subr.mxu0 0.0
    %1002 = vmatpush1.msra.mxu0 0.0
    %1003 = vmatprep.subr.mxu0 0.0
    %1004 = vmatpush1.msra.mxu0 0.0
    %1005 = vmatprep.subr.mxu0 0.0
    %1006 = vmatpush1.msra.mxu0 0.0
    %1007 = vmatprep.subr.mxu0 0.0
    %1008 = vmatpush1.msra.mxu0 0.0
    %1009 = vmatprep.subr.mxu0 0.0
    %1010 = vmatpush1.msra.mxu0 0.0
    %1011 = vmatprep.subr.mxu0 0.0
    %1012 = vmatpush1.msra.mxu0 0.0
    %1013 = vmatprep.subr.mxu0 0.0
    %1014 = vmatpush1.msra.mxu0 0.0
    %1015 = vmatprep.subr.mxu0 0.0
    %1016 = vmatpush1.msra.mxu0 0.0
    %1017 = vmatprep.subr.mxu0 0.0
    %1018 = vmatpush1.msra.mxu0 0.0
    %1019 = vmatprep.subr.mxu0 0.0
    %1020 = vmatpush1.msra.mxu0 0.0
    %1021 = vmatprep.subr.mxu0 0.0
    %1022 = vmatpush1.msra.mxu0 0.0
    %1023 = vmatprep.subr.mxu0 0.0
    %1024 = vmatpush1.msra.mxu0 0.0
    %1025 = vmatprep.subr.mxu0 0.0
    %1026 = vmatpush1.msra.mxu0 0.0
    %1027 = vmatprep.subr.mxu0 0.0
    %1028 = vmatpush1.msra.mxu0 0.0
    %1029 = vmatprep.subr.mxu0 0.0
    %1030 = vmatpush1.msra.mxu0 0.0
    %1031 = vmatprep.subr.mxu0 0.0
    %1032 = vmatpush1.msra.mxu0 0.0
    %1033 = vmatprep.mubr.f32.mxu0 0.0
    %1034 = vmatmul.mubr.f32.gmra.mrb[0].mxu0 %v968
    %v1035 = vpop.f32.mrb[0].mxu0
    %v1036 = vadd.f32 0.0, %v1035
    %v1037 = vpop.f32.mrb[0].mxu0
    %1038 = vdwg.mxu0
    %v1039 = vmul.f32 %v1036, 0.001953125
    %v1040 = vmul.f32 %v1039, %v1039
    %v1042 = vrot.slane %v1040, 7
    %v1044 = vsub.f32 %v1039, %v1042
    %v1045 = vadd.f32 %v1044, 1e-05
    %v1046 = vrsqrt.pop %v1045
    %v1048 = vrot.slane %v1046, 7
    %v1050 = vmul.f32 %v67, %v1048
    %v1052 = vrot.slane %v1050, 2
    %v1054 = vmul.f32 %v1039, %v1052
    %v1056 = vrot.slane %v1054, 5
    %v1058 = vsub.f32 %v67, %v1056
    %v1060 = vrot.slane %v1058, 2
    %v1062 = vsel %vm438, %v1052, %v1060
    %v1064 = vsel %vm528, %v1062, 0
    %1066 = vmatprep.subr.mxu0 0.0
    %1067 = vmatpush1.msra.mxu0 %v66
    %1068 = vmatprep.subr.mxu0 0.0
    %1069 = vmatpush1.msra.mxu0 0.0
    %1070 = vmatprep.subr.mxu0 0.0
    %1071 = vmatpush1.msra.mxu0 0.0
    %1072 = vmatprep.subr.mxu0 0.0
    %1073 = vmatpush1.msra.mxu0 0.0
    %1074 = vmatprep.subr.mxu0 0.0
    %1075 = vmatpush1.msra.mxu0 0.0
    %1076 = vmatprep.subr.mxu0 0.0
    %1077 = vmatpush1.msra.mxu0 0.0
    %1078 = vmatprep.subr.mxu0 0.0
    %1079 = vmatpush1.msra.mxu0 0.0
    %1080 = vmatprep.subr.mxu0 0.0
    %1081 = vmatpush1.msra.mxu0 0.0
    %1082 = vmatprep.subr.mxu0 0.0
    %1083 = vmatpush1.msra.mxu0 0.0
    %1084 = vmatprep.subr.mxu0 0.0
    %1085 = vmatpush1.msra.mxu0 0.0
    %1086 = vmatprep.subr.mxu0 0.0
    %1087 = vmatpush1.msra.mxu0 0.0
    %1088 = vmatprep.subr.mxu0 0.0
    %1089 = vmatpush1.msra.mxu0 0.0
    %1090 = vmatprep.subr.mxu0 0.0
    %1091 = vmatpush1.msra.mxu0 0.0
    %1092 = vmatprep.subr.mxu0 0.0
    %1093 = vmatpush1.msra.mxu0 0.0
    %1094 = vmatprep.subr.mxu0 0.0
    %1095 = vmatpush1.msra.mxu0 0.0
    %1096 = vmatprep.subr.mxu0 0.0
    %1097 = vmatpush1.msra.mxu0 0.0
    %1098 = vmatprep.subr.mxu0 0.0
    %1099 = vmatpush1.msra.mxu0 0.0
    %1100 = vmatprep.subr.mxu0 0.0
    %1101 = vmatpush1.msra.mxu0 0.0
    %1102 = vmatprep.subr.mxu0 0.0
    %1103 = vmatpush1.msra.mxu0 0.0
    %1104 = vmatprep.subr.mxu0 0.0
    %1105 = vmatpush1.msra.mxu0 0.0
    %1106 = vmatprep.subr.mxu0 0.0
    %1107 = vmatpush1.msra.mxu0 0.0
    %1108 = vmatprep.subr.mxu0 0.0
    %1109 = vmatpush1.msra.mxu0 0.0
    %1110 = vmatprep.subr.mxu0 0.0
    %1111 = vmatpush1.msra.mxu0 0.0
    %1112 = vmatprep.subr.mxu0 0.0
    %1113 = vmatpush1.msra.mxu0 0.0
    %1114 = vmatprep.subr.mxu0 0.0
    %1115 = vmatpush1.msra.mxu0 0.0
    %1116 = vmatprep.subr.mxu0 0.0
    %1117 = vmatpush1.msra.mxu0 0.0
    %1118 = vmatprep.subr.mxu0 0.0
    %1119 = vmatpush1.msra.mxu0 0.0
    %1120 = vmatprep.subr.mxu0 0.0
    %1121 = vmatpush1.msra.mxu0 0.0
    %1122 = vmatprep.subr.mxu0 0.0
    %1123 = vmatpush1.msra.mxu0 0.0
    %1124 = vmatprep.subr.mxu0 0.0
    %1125 = vmatpush1.msra.mxu0 0.0
    %1126 = vmatprep.subr.mxu0 0.0
    %1127 = vmatpush1.msra.mxu0 0.0
    %1128 = vmatprep.subr.mxu0 0.0
    %1129 = vmatpush1.msra.mxu0 0.0
    %1130 = vmatprep.mubr.f32.mxu0 0.0
    %1131 = vmatmul.mubr.f32.gmra.mrb[0].mxu0 %v1064
    %v1132 = vpop.f32.mrb[0].mxu0
    %v1133 = vadd.f32 0.0, %v1132
    %v1134 = vpop.f32.mrb[0].mxu0
    %1135 = vdwg.mxu0
    %v1136 = vlaneseq
    %v1137 = vshrl.u32 %v1136, 7
    %v1138 = vsub.s32 0, %v1137
    %v1139 = vrot.slane %v1133, %v1138
    %v1140 = vmul.f32 %v928, %v1139
    %v1141 = vmul.f32 %v933, %v1139
    %v1142 = vmul.f32 %v938, %v1139
    %v1143 = vmul.f32 %v943, %v1139
    %v1144 = vlaneseq
    %v1145 = vshrl.u32 %v1144, 7
    %v1146 = vsub.s32 1, %v1145
    %v1147 = vrot.slane %v1133, %v1146
    %v1148 = vadd.f32 %v1140, %v1147
    %v1149 = vadd.f32 %v1141, %v1147
    %v1150 = vadd.f32 %v1142, %v1147
    %v1151 = vadd.f32 %v1143, %v1147
    %v1152 = vadd.f32 %v1148, %v38
    %v1153 = vadd.f32 %v1149, %v39
    %v1154 = vadd.f32 %v1150, %v40
    %v1155 = vadd.f32 %v1151, %v41
    %v1156 = vmax.f32 %v1152, 0.0
    %v1157 = vmax.f32 %v1153, 0.0
    %v1158 = vmax.f32 %v1154, 0.0
    %v1159 = vmax.f32 %v1155, 0.0
    %1160 = vst [vmem:[#allocation5] sm:$0xff] %v1156
    %1161 = vst [vmem:[#allocation5 + $0x8] sm:$0xff] %v1157
    %1162 = vst [vmem:[#allocation5 + $0x10] sm:$0xff] %v1158
    %1163 = vst [vmem:[#allocation5 + $0x18] sm:$0xff] %v1159
    // Predicated region
    $region30: #{tpu_custom_call.1} parent=1 // pred_check
      _
    $region31: #{tpu_custom_call.1} parent=1 // pred_check_branch
      %1165 = sbr.rel (0) target = $region33
    $region32: #{tpu_custom_call.1} parent=1 // pred_region
      %s1167 = ssub.s32 512, 512
      %1168 = vsyncadd [#allocation4], %s1167
      %s1169 = sshll.u32 [#allocation5], 4
      %s1170 = int_to_ptr.vmem [resolvable:$true] %s1169
      %1175 = dma.vmem_to_hbm [thread:$0]  %s1170, 512, %s6, [#allocation4], 128, 128, 8
    $region33: #{tpu_custom_call.1} parent=1 // pred_fallthru
      _
    // Predicated region
    $region34: #{tpu_custom_call.1} parent=1 // pred_check
      _
    $region35: #{tpu_custom_call.1} parent=1 // pred_check_branch
      %1177 = sbr.rel (0) target = $region37
    $region36: #{tpu_custom_call.1} parent=1 // pred_region
      %1178 = dma.done [#allocation4], 512
    $region37: #{tpu_custom_call.1} parent=1 // pred_fallthru
      _
    %1179 = vsyncpa [#allocation3], 1
    %1180 = vsyncpa [#allocation4], 1

</llo_original>
